<compile_context>
chip_gen: v7x
topology: tpu7x:2x2x1
jax: 0.10.0
libtpu: 0.0.40
codegen_flags: <defaults>
</compile_context>

<pallas_src>
import math

import jax
import jax.numpy as jnp
from jax.experimental import pallas as pl
from jax.experimental.pallas import tpu as pltpu


def _round_up(x, m):
    return ((x + m - 1) // m) * m


def qnetwork_kernel(x_ref, w1_ref, b1_ref, w2_ref, b2_ref, w3_ref, b3_ref, o_ref):
    x = x_ref[...]

    # Layer 1: Linear + ReLU
    h1 = jnp.dot(x, w1_ref[...], preferred_element_type=jnp.float32) + b1_ref[...]
    h1 = jnp.maximum(h1, 0.0)

    # Layer 2: Linear + ReLU
    h2 = jnp.dot(h1, w2_ref[...], preferred_element_type=jnp.float32) + b2_ref[...]
    h2 = jnp.maximum(h2, 0.0)

    # Layer 3: Linear (no activation)
    out = jnp.dot(h2, w3_ref[...], preferred_element_type=jnp.float32) + b3_ref[...]
    o_ref[...] = out.astype(o_ref.dtype)


def _select_tiling(B, max_tile=2048):
    """Choose (tile_b, n_tiles, B_pad).

    - tiles of up to `max_tile` rows to amortize per-grid-step overhead,
    - at least 2 tiles once the batch is >= 1024 rows so the batch axis can be
      sharded across both TensorCores on v7x (no-op on v5e/v6e),
    - tile_b is picked so B_pad - B < 8, i.e. no extra jnp.pad traffic for any
      batch that is already a multiple of 8.
    """
    B8 = _round_up(max(B, 1), 8)
    n_tiles = max(1, -(-B8 // max_tile))          # ceil(B8 / max_tile)
    if B8 >= 1024:
        n_tiles = max(n_tiles, 2)                 # keep both v7x TCs busy
    tile_b = _round_up(-(-B8 // n_tiles), 8)      # ceil(B8 / n_tiles), /8-aligned
    B_pad = tile_b * n_tiles
    return tile_b, n_tiles, B_pad


def qnetwork_forward(state, params, max_tile_b=2048):
    """state: (B, num_in_pol) f32. params: dict of w1,b1,w2,b2,w3,b3."""
    B, num_in = state.shape
    hidden = params["w1"].shape[1]
    num_out = params["w3"].shape[1]

    tile_b, n_tiles, B_pad = _select_tiling(B, max_tile_b)
    x = state if B_pad == B else jnp.pad(state, ((0, B_pad - B), (0, 0)))

    vmem = pltpu.MemorySpace.VMEM

    def resident(a):
        # Constant index_map -> same block every grid step -> weights/biases
        # are DMA'd once and stay VMEM-resident across the whole grid.
        return pl.BlockSpec(a.shape, lambda i: (0, 0), memory_space=vmem)

    f32 = 4
    vmem_needed = (
        2 * tile_b * (num_in + num_out) * f32            # double-buffered in/out tiles
        + 2 * tile_b * hidden * f32                      # h1 / h2 activations
        + (num_in * hidden + hidden * hidden
           + hidden * num_out + 3 * hidden + num_out) * f32   # resident params
        + (4 << 20)                                      # compiler scratch headroom
    )
    vmem_limit = int(min(max(vmem_needed, 16 << 20), 48 << 20))

    out = pl.pallas_call(
        qnetwork_kernel,
        grid=(n_tiles,),
        out_shape=jax.ShapeDtypeStruct((B_pad, num_out), jnp.float32),
        in_specs=[
            pl.BlockSpec((tile_b, num_in), lambda i: (i, 0), memory_space=vmem),
            resident(params["w1"]),
            resident(params["b1"]),
            resident(params["w2"]),
            resident(params["b2"]),
            resident(params["w3"]),
            resident(params["b3"]),
        ],
        out_specs=pl.BlockSpec((tile_b, num_out), lambda i: (i, 0),
                               memory_space=vmem),
        compiler_params=pltpu.CompilerParams(
            dimension_semantics=("parallel",),
            vmem_limit_bytes=vmem_limit,
        ),
    )(x, params["w1"], params["b1"], params["w2"], params["b2"],
      params["w3"], params["b3"])

    return out[:B] if B_pad != B else out


def init_params(key, num_in_pol, hidden, num_out_pol):
    """Deterministic parameter init mirroring the PyTorch module.

    Layer 0: weight filled with 1, bias filled with 0 (as in __init__).
    Layers 1, 2: PyTorch default Linear init (uniform(+/- 1/sqrt(fan_in))).
    Weights are stored as (in_features, out_features).
    """
    k2w, k2b, k3w, k3b = jax.random.split(key, 4)

    w1 = jnp.ones((num_in_pol, hidden), dtype=jnp.float32)
    b1 = jnp.zeros((1, hidden), dtype=jnp.float32)

    bound2 = 1.0 / math.sqrt(hidden)
    w2 = jax.random.uniform(k2w, (hidden, hidden), jnp.float32, -bound2, bound2)
    b2 = jax.random.uniform(k2b, (1, hidden), jnp.float32, -bound2, bound2)

    bound3 = 1.0 / math.sqrt(hidden)
    w3 = jax.random.uniform(k3w, (hidden, num_out_pol), jnp.float32, -bound3, bound3)
    b3 = jax.random.uniform(k3b, (1, num_out_pol), jnp.float32, -bound3, bound3)

    return {"w1": w1, "b1": b1, "w2": w2, "b2": b2, "w3": w3, "b3": b3}


if __name__ == "__main__":
    # Small shapes consistent with the module (Config.hidden_sizes = (32, 32)).
    B = 8
    num_in_pol = 16
    hidden = 32
    num_out_pol = 8

    key = jax.random.PRNGKey(0)
    k_x, k_p = jax.random.split(key)

    state = jax.random.normal(k_x, (B, num_in_pol), dtype=jnp.float32)
    params = init_params(k_p, num_in_pol, hidden, num_out_pol)

    out = qnetwork_forward(state, params)
    jax.block_until_ready(out)

    # Pure-JAX reference check.
    h1 = jnp.maximum(state @ params["w1"] + params["b1"], 0.0)
    h2 = jnp.maximum(h1 @ params["w2"] + params["b2"], 0.0)
    ref = h2 @ params["w3"] + params["b3"]
    assert out.shape == (B, num_out_pol)
    assert jnp.allclose(out, ref, atol=1e-5, rtol=1e-5)

    print("KERNEL_OK")
</pallas_src>

<mosaic_0001>
module attributes {stable_mosaic.version = 11 : i64} {
  func.func @qnetwork_kernel(%arg0: i32, %arg1: memref<8x16xf32, #tpu.memory_space<vmem>>, %arg2: memref<16x32xf32, #tpu.memory_space<vmem>>, %arg3: memref<1x32xf32, #tpu.memory_space<vmem>>, %arg4: memref<32x32xf32, #tpu.memory_space<vmem>>, %arg5: memref<1x32xf32, #tpu.memory_space<vmem>>, %arg6: memref<32x8xf32, #tpu.memory_space<vmem>>, %arg7: memref<1x8xf32, #tpu.memory_space<vmem>>, %arg8: memref<8x8xf32, #tpu.memory_space<vmem>>) attributes {dimension_semantics = [#tpu.dimension_semantics<parallel>], iteration_bounds = array<i64: 1>, scalar_prefetch = 0 : i64, scratch_operands = 0 : i64, tpu.core_type = #tpu.core_type<tc>, window_params = [{transform_indices = @transform_0, window_bounds = array<i64: 8, 16>}, {pipeline_mode = #tpu.pipeline_mode<synchronous>, transform_indices = @transform_1, window_bounds = array<i64: 16, 32>}, {pipeline_mode = #tpu.pipeline_mode<synchronous>, transform_indices = @transform_2, window_bounds = array<i64: 1, 32>}, {pipeline_mode = #tpu.pipeline_mode<synchronous>, transform_indices = @transform_3, window_bounds = array<i64: 32, 32>}, {pipeline_mode = #tpu.pipeline_mode<synchronous>, transform_indices = @transform_4, window_bounds = array<i64: 1, 32>}, {pipeline_mode = #tpu.pipeline_mode<synchronous>, transform_indices = @transform_5, window_bounds = array<i64: 32, 8>}, {pipeline_mode = #tpu.pipeline_mode<synchronous>, transform_indices = @transform_6, window_bounds = array<i64: 1, 8>}, {transform_indices = @transform_7, window_bounds = array<i64: 8, 8>}]} {
    %c0 = arith.constant 0 : index
    %c0_0 = arith.constant 0 : index
    %0 = vector.load %arg1[%c0, %c0_0] : memref<8x16xf32, #tpu.memory_space<vmem>>, vector<8x16xf32>
    %c0_1 = arith.constant 0 : index
    %c0_2 = arith.constant 0 : index
    %1 = vector.load %arg2[%c0_1, %c0_2] : memref<16x32xf32, #tpu.memory_space<vmem>>, vector<16x32xf32>
    %cst = arith.constant dense<0.000000e+00> : vector<8x32xf32>
    %2 = tpu.matmul %0, %1, %cst {dimension_numbers = #tpu.dot_dimension_numbers<[1], [0], [0], [1], [0, 0, 1, 1], [], []>} : vector<8x16xf32>, vector<16x32xf32>, vector<8x32xf32> -> vector<8x32xf32>
    %c0_3 = arith.constant 0 : index
    %c0_4 = arith.constant 0 : index
    %3 = vector.load %arg3[%c0_3, %c0_4] : memref<1x32xf32, #tpu.memory_space<vmem>>, vector<1x32xf32>
    %4 = vector.broadcast %3 : vector<1x32xf32> to vector<8x32xf32>
    %5 = arith.addf %2, %4 : vector<8x32xf32>
    %cst_5 = arith.constant 0.000000e+00 : f32
    %6 = vector.broadcast %cst_5 : f32 to vector<8x32xf32>
    %7 = arith.maximumf %5, %6 : vector<8x32xf32>
    %c0_6 = arith.constant 0 : index
    %c0_7 = arith.constant 0 : index
    %8 = vector.load %arg4[%c0_6, %c0_7] : memref<32x32xf32, #tpu.memory_space<vmem>>, vector<32x32xf32>
    %cst_8 = arith.constant dense<0.000000e+00> : vector<8x32xf32>
    %9 = tpu.matmul %7, %8, %cst_8 {dimension_numbers = #tpu.dot_dimension_numbers<[1], [0], [0], [1], [0, 0, 1, 1], [], []>} : vector<8x32xf32>, vector<32x32xf32>, vector<8x32xf32> -> vector<8x32xf32>
    %c0_9 = arith.constant 0 : index
    %c0_10 = arith.constant 0 : index
    %10 = vector.load %arg5[%c0_9, %c0_10] : memref<1x32xf32, #tpu.memory_space<vmem>>, vector<1x32xf32>
    %11 = vector.broadcast %10 : vector<1x32xf32> to vector<8x32xf32>
    %12 = arith.addf %9, %11 : vector<8x32xf32>
    %cst_11 = arith.constant 0.000000e+00 : f32
    %13 = vector.broadcast %cst_11 : f32 to vector<8x32xf32>
    %14 = arith.maximumf %12, %13 : vector<8x32xf32>
    %c0_12 = arith.constant 0 : index
    %c0_13 = arith.constant 0 : index
    %15 = vector.load %arg6[%c0_12, %c0_13] : memref<32x8xf32, #tpu.memory_space<vmem>>, vector<32x8xf32>
    %cst_14 = arith.constant dense<0.000000e+00> : vector<8x8xf32>
    %16 = tpu.matmul %14, %15, %cst_14 {dimension_numbers = #tpu.dot_dimension_numbers<[1], [0], [0], [1], [0, 0, 1, 1], [], []>} : vector<8x32xf32>, vector<32x8xf32>, vector<8x8xf32> -> vector<8x8xf32>
    %c0_15 = arith.constant 0 : index
    %c0_16 = arith.constant 0 : index
    %17 = vector.load %arg7[%c0_15, %c0_16] : memref<1x8xf32, #tpu.memory_space<vmem>>, vector<1x8xf32>
    %18 = vector.broadcast %17 : vector<1x8xf32> to vector<8x8xf32>
    %19 = arith.addf %16, %18 : vector<8x8xf32>
    %c0_17 = arith.constant 0 : index
    %c0_18 = arith.constant 0 : index
    %20 = vector.load %arg8[%c0_17, %c0_18] : memref<8x8xf32, #tpu.memory_space<vmem>>, vector<8x8xf32>
    tpu.vector_store %arg8[%c0_17, %c0_18], %19 {strides = array<i32>} : memref<8x8xf32, #tpu.memory_space<vmem>>, vector<8x8xf32>,
    return
  }
  func.func @transform_0(%arg0: i32) -> (i32, i32) {
    %c0_i32 = arith.constant 0 : i32
    %c0_i32_0 = arith.constant 0 : i32
    return %arg0, %c0_i32 : i32, i32
  }
  func.func @transform_1(%arg0: i32) -> (i32, i32) {
    %c0_i32 = arith.constant 0 : i32
    %c0_i32_0 = arith.constant 0 : i32
    %c0_i32_1 = arith.constant 0 : i32
    return %c0_i32, %c0_i32_0 : i32, i32
  }
  func.func @transform_2(%arg0: i32) -> (i32, i32) {
    %c0_i32 = arith.constant 0 : i32
    %c0_i32_0 = arith.constant 0 : i32
    %c0_i32_1 = arith.constant 0 : i32
    return %c0_i32, %c0_i32_0 : i32, i32
  }
  func.func @transform_3(%arg0: i32) -> (i32, i32) {
    %c0_i32 = arith.constant 0 : i32
    %c0_i32_0 = arith.constant 0 : i32
    %c0_i32_1 = arith.constant 0 : i32
    return %c0_i32, %c0_i32_0 : i32, i32
  }
  func.func @transform_4(%arg0: i32) -> (i32, i32) {
    %c0_i32 = arith.constant 0 : i32
    %c0_i32_0 = arith.constant 0 : i32
    %c0_i32_1 = arith.constant 0 : i32
    return %c0_i32, %c0_i32_0 : i32, i32
  }
  func.func @transform_5(%arg0: i32) -> (i32, i32) {
    %c0_i32 = arith.constant 0 : i32
    %c0_i32_0 = arith.constant 0 : i32
    %c0_i32_1 = arith.constant 0 : i32
    return %c0_i32, %c0_i32_0 : i32, i32
  }
  func.func @transform_6(%arg0: i32) -> (i32, i32) {
    %c0_i32 = arith.constant 0 : i32
    %c0_i32_0 = arith.constant 0 : i32
    %c0_i32_1 = arith.constant 0 : i32
    return %c0_i32, %c0_i32_0 : i32, i32
  }
  func.func @transform_7(%arg0: i32) -> (i32, i32) {
    %c0_i32 = arith.constant 0 : i32
    %c0_i32_0 = arith.constant 0 : i32
    return %arg0, %c0_i32 : i32, i32
  }
}

</mosaic_0001>

<llo_original>
// kernel: tpu_custom_call.1
$region0: #{tpu_custom_call.1}
  #allocation0 [shape = 'u32[]', space=smem, size = 0x4, offset = 0x4, fixed_abs, tag = 'smem constant byte address 0x4 - core index']
  #allocation1 [shape = 'u32[144,128]{1,0:T(1,128)}', space=vmem, size = 0x12000, scoped, tag = 'internal scratch']
  %s0 = inlined_call_operand.hbm [shape: f32[8,16], index: 0, kind: input, shape index: {}]
  %s1 = inlined_call_operand.vmem [shape: f32[16,32], index: 1, kind: input, shape index: {}]
  %s2 = inlined_call_operand.vmem [shape: f32[1,32], index: 2, kind: input, shape index: {}]
  %s3 = inlined_call_operand.vmem [shape: f32[32,32], index: 3, kind: input, shape index: {}]
  %s4 = inlined_call_operand.vmem [shape: f32[1,32], index: 4, kind: input, shape index: {}]
  %s5 = inlined_call_operand.vmem [shape: f32[32,8], index: 5, kind: input, shape index: {}]
  %s6 = inlined_call_operand.vmem [shape: f32[1,8], index: 6, kind: input, shape index: {}]
  %s7 = inlined_call_operand.hbm [shape: f32[8,8], index: 7, kind: output, shape index: {}]
  %s8 = sld [smem:[#allocation0]]
  $region42: #{tpu_custom_call.1} parent=0
    _
  %s10 = ssub.s32 1, %s8
  %s11 = scalar_select 0, %s10, %s8
  $region1: #{tpu_custom_call.1} parent=0
    #allocation2 [shape = 'u8[4096]{0}', space=vmem, size = 0x1000, scoped, tag = 'input window, operand 0, single buffered']
    #allocation3 [shape = 's32[1]{0}', space=sflag, size = 0x4, scoped, tag = 'scoped memory for tpu_custom_call.1']
    #allocation4 [shape = 's32[1]{0}', space=sflag, size = 0x4, scoped, tag = 'scoped memory for tpu_custom_call.1']
    #allocation5 [shape = 'u8[4096]{0}', space=vmem, size = 0x1000, scoped, tag = 'output window, operand 0, single buffered']
    %12 = vsyncpa [#allocation3], 0
    %13 = vsyncpa [#allocation4], 0
    // Predicated region
    $region2: #{tpu_custom_call.1} parent=1 // pred_check
      _
    $region3: #{tpu_custom_call.1} parent=1 // pred_check_branch
      %15 = sbr.rel (0) target = $region5
    $region4: #{tpu_custom_call.1} parent=1 // pred_region
      %s17 = ssub.s32 128, 128
      %18 = vsyncadd [#allocation3], %s17
      %s20 = sshll.u32 [#allocation2], 4
      %s21 = int_to_ptr.vmem [resolvable:$true] %s20
      %23 = dma.hbm_to_vmem [thread:$0]  %s0, 128, %s21, [#allocation3]
    $region5: #{tpu_custom_call.1} parent=1 // pred_fallthru
      _
    // Predicated region
    $region6: #{tpu_custom_call.1} parent=1 // pred_check
      _
    $region7: #{tpu_custom_call.1} parent=1 // pred_check_branch
      %25 = sbr.rel (0) target = $region9
    $region8: #{tpu_custom_call.1} parent=1 // pred_region
      _
    $region9: #{tpu_custom_call.1} parent=1 // pred_fallthru
      _
    // Predicated region
    $region10: #{tpu_custom_call.1} parent=1 // pred_check
      _
    $region11: #{tpu_custom_call.1} parent=1 // pred_check_branch
      %27 = sbr.rel (0) target = $region13
    $region12: #{tpu_custom_call.1} parent=1 // pred_region
      _
    $region13: #{tpu_custom_call.1} parent=1 // pred_fallthru
      _
    // Predicated region
    $region14: #{tpu_custom_call.1} parent=1 // pred_check
      _
    $region15: #{tpu_custom_call.1} parent=1 // pred_check_branch
      %29 = sbr.rel (0) target = $region17
    $region16: #{tpu_custom_call.1} parent=1 // pred_region
      _
    $region17: #{tpu_custom_call.1} parent=1 // pred_fallthru
      _
    // Predicated region
    $region18: #{tpu_custom_call.1} parent=1 // pred_check
      _
    $region19: #{tpu_custom_call.1} parent=1 // pred_check_branch
      %31 = sbr.rel (0) target = $region21
    $region20: #{tpu_custom_call.1} parent=1 // pred_region
      _
    $region21: #{tpu_custom_call.1} parent=1 // pred_fallthru
      _
    // Predicated region
    $region22: #{tpu_custom_call.1} parent=1 // pred_check
      _
    $region23: #{tpu_custom_call.1} parent=1 // pred_check_branch
      %33 = sbr.rel (0) target = $region25
    $region24: #{tpu_custom_call.1} parent=1 // pred_region
      _
    $region25: #{tpu_custom_call.1} parent=1 // pred_fallthru
      _
    // Predicated region
    $region26: #{tpu_custom_call.1} parent=1 // pred_check
      _
    $region27: #{tpu_custom_call.1} parent=1 // pred_check_branch
      %35 = sbr.rel (0) target = $region29
    $region28: #{tpu_custom_call.1} parent=1 // pred_region
      _
    $region29: #{tpu_custom_call.1} parent=1 // pred_fallthru
      _
    // Predicated region
    $region30: #{tpu_custom_call.1} parent=1 // pred_check
      _
    $region31: #{tpu_custom_call.1} parent=1 // pred_check_branch
      %37 = sbr.rel (0) target = $region33
    $region32: #{tpu_custom_call.1} parent=1 // pred_region
      %38 = dma.done [#allocation3], 128
    $region33: #{tpu_custom_call.1} parent=1 // pred_fallthru
      _
    %v39 = vld [vmem:[#allocation2] sm:$0xff]
    %v40 = vld [vmem:[%s1] sm:$0xff]
    %v41 = vld [vmem:[%s1 + $0x8] sm:$0xff]
    %v42 = vld [vmem:[%s2] sm:$0x1]
    %v44 = vlaneseq
    %v45 = vshrl.u32 %v44, 7
    %v46 = vsub.s32 0, %v45
    %v47 = vrot.slane %v42, %v46
    %vm49 = vcmask 130048
    %v51 = vsel %vm49, %v39, 0
    %53 = vmatprep.subr.mxu0 0.0
    %54 = vmatpush1.msra.mxu0 %v40
    %55 = vmatprep.subr.mxu0 0.0
    %56 = vmatpush1.msra.mxu0 %v41
    %57 = vmatprep.subr.mxu0 0.0
    %58 = vmatpush1.msra.mxu0 0.0
    %59 = vmatprep.subr.mxu0 0.0
    %60 = vmatpush1.msra.mxu0 0.0
    %61 = vmatprep.subr.mxu0 0.0
    %62 = vmatpush1.msra.mxu0 0.0
    %63 = vmatprep.subr.mxu0 0.0
    %64 = vmatpush1.msra.mxu0 0.0
    %65 = vmatprep.subr.mxu0 0.0
    %66 = vmatpush1.msra.mxu0 0.0
    %67 = vmatprep.subr.mxu0 0.0
    %68 = vmatpush1.msra.mxu0 0.0
    %69 = vmatprep.subr.mxu0 0.0
    %70 = vmatpush1.msra.mxu0 0.0
    %71 = vmatprep.subr.mxu0 0.0
    %72 = vmatpush1.msra.mxu0 0.0
    %73 = vmatprep.subr.mxu0 0.0
    %74 = vmatpush1.msra.mxu0 0.0
    %75 = vmatprep.subr.mxu0 0.0
    %76 = vmatpush1.msra.mxu0 0.0
    %77 = vmatprep.subr.mxu0 0.0
    %78 = vmatpush1.msra.mxu0 0.0
    %79 = vmatprep.subr.mxu0 0.0
    %80 = vmatpush1.msra.mxu0 0.0
    %81 = vmatprep.subr.mxu0 0.0
    %82 = vmatpush1.msra.mxu0 0.0
    %83 = vmatprep.subr.mxu0 0.0
    %84 = vmatpush1.msra.mxu0 0.0
    %85 = vmatprep.subr.mxu0 0.0
    %86 = vmatpush1.msra.mxu0 0.0
    %87 = vmatprep.subr.mxu0 0.0
    %88 = vmatpush1.msra.mxu0 0.0
    %89 = vmatprep.subr.mxu0 0.0
    %90 = vmatpush1.msra.mxu0 0.0
    %91 = vmatprep.subr.mxu0 0.0
    %92 = vmatpush1.msra.mxu0 0.0
    %93 = vmatprep.subr.mxu0 0.0
    %94 = vmatpush1.msra.mxu0 0.0
    %95 = vmatprep.subr.mxu0 0.0
    %96 = vmatpush1.msra.mxu0 0.0
    %97 = vmatprep.subr.mxu0 0.0
    %98 = vmatpush1.msra.mxu0 0.0
    %99 = vmatprep.subr.mxu0 0.0
    %100 = vmatpush1.msra.mxu0 0.0
    %101 = vmatprep.subr.mxu0 0.0
    %102 = vmatpush1.msra.mxu0 0.0
    %103 = vmatprep.subr.mxu0 0.0
    %104 = vmatpush1.msra.mxu0 0.0
    %105 = vmatprep.subr.mxu0 0.0
    %106 = vmatpush1.msra.mxu0 0.0
    %107 = vmatprep.subr.mxu0 0.0
    %108 = vmatpush1.msra.mxu0 0.0
    %109 = vmatprep.subr.mxu0 0.0
    %110 = vmatpush1.msra.mxu0 0.0
    %111 = vmatprep.subr.mxu0 0.0
    %112 = vmatpush1.msra.mxu0 0.0
    %113 = vmatprep.subr.mxu0 0.0
    %114 = vmatpush1.msra.mxu0 0.0
    %115 = vmatprep.subr.mxu0 0.0
    %116 = vmatpush1.msra.mxu0 0.0
    %117 = vmatprep.mubr.f32.mxu0 0.0
    %118 = vmatmul.mubr.f32.gmra.mrb[0].mxu0 %v51
    %v119 = vpop.f32.mrb[0].mxu0
    %v120 = vadd.f32 %v47, %v119
    %v121 = vpop.f32.mrb[0].mxu0
    %122 = vdwg.mxu0
    %v123 = vmax.f32 %v120, 0.0
    %v124 = vld [vmem:[%s3] sm:$0xff]
    %v125 = vld [vmem:[%s3 + $0x8] sm:$0xff]
    %v126 = vld [vmem:[%s3 + $0x10] sm:$0xff]
    %v127 = vld [vmem:[%s3 + $0x18] sm:$0xff]
    %v128 = vld [vmem:[%s4] sm:$0x1]
    %v130 = vlaneseq
    %v131 = vshrl.u32 %v130, 7
    %v132 = vsub.s32 0, %v131
    %v133 = vrot.slane %v128, %v132
    %vm135 = vcmask 261120
    %v137 = vsel %vm135, %v123, 0
    %139 = vmatprep.subr.mxu0 0.0
    %140 = vmatpush1.msra.mxu0 %v124
    %141 = vmatprep.subr.mxu0 0.0
    %142 = vmatpush1.msra.mxu0 %v125
    %143 = vmatprep.subr.mxu0 0.0
    %144 = vmatpush1.msra.mxu0 %v126
    %145 = vmatprep.subr.mxu0 0.0
    %146 = vmatpush1.msra.mxu0 %v127
    %147 = vmatprep.subr.mxu0 0.0
    %148 = vmatpush1.msra.mxu0 0.0
    %149 = vmatprep.subr.mxu0 0.0
    %150 = vmatpush1.msra.mxu0 0.0
    %151 = vmatprep.subr.mxu0 0.0
    %152 = vmatpush1.msra.mxu0 0.0
    %153 = vmatprep.subr.mxu0 0.0
    %154 = vmatpush1.msra.mxu0 0.0
    %155 = vmatprep.subr.mxu0 0.0
    %156 = vmatpush1.msra.mxu0 0.0
    %157 = vmatprep.subr.mxu0 0.0
    %158 = vmatpush1.msra.mxu0 0.0
    %159 = vmatprep.subr.mxu0 0.0
    %160 = vmatpush1.msra.mxu0 0.0
    %161 = vmatprep.subr.mxu0 0.0
    %162 = vmatpush1.msra.mxu0 0.0
    %163 = vmatprep.subr.mxu0 0.0
    %164 = vmatpush1.msra.mxu0 0.0
    %165 = vmatprep.subr.mxu0 0.0
    %166 = vmatpush1.msra.mxu0 0.0
    %167 = vmatprep.subr.mxu0 0.0
    %168 = vmatpush1.msra.mxu0 0.0
    %169 = vmatprep.subr.mxu0 0.0
    %170 = vmatpush1.msra.mxu0 0.0
    %171 = vmatprep.subr.mxu0 0.0
    %172 = vmatpush1.msra.mxu0 0.0
    %173 = vmatprep.subr.mxu0 0.0
    %174 = vmatpush1.msra.mxu0 0.0
    %175 = vmatprep.subr.mxu0 0.0
    %176 = vmatpush1.msra.mxu0 0.0
    %177 = vmatprep.subr.mxu0 0.0
    %178 = vmatpush1.msra.mxu0 0.0
    %179 = vmatprep.subr.mxu0 0.0
    %180 = vmatpush1.msra.mxu0 0.0
    %181 = vmatprep.subr.mxu0 0.0
    %182 = vmatpush1.msra.mxu0 0.0
    %183 = vmatprep.subr.mxu0 0.0
    %184 = vmatpush1.msra.mxu0 0.0
    %185 = vmatprep.subr.mxu0 0.0
    %186 = vmatpush1.msra.mxu0 0.0
    %187 = vmatprep.subr.mxu0 0.0
    %188 = vmatpush1.msra.mxu0 0.0
    %189 = vmatprep.subr.mxu0 0.0
    %190 = vmatpush1.msra.mxu0 0.0
    %191 = vmatprep.subr.mxu0 0.0
    %192 = vmatpush1.msra.mxu0 0.0
    %193 = vmatprep.subr.mxu0 0.0
    %194 = vmatpush1.msra.mxu0 0.0
    %195 = vmatprep.subr.mxu0 0.0
    %196 = vmatpush1.msra.mxu0 0.0
    %197 = vmatprep.subr.mxu0 0.0
    %198 = vmatpush1.msra.mxu0 0.0
    %199 = vmatprep.subr.mxu0 0.0
    %200 = vmatpush1.msra.mxu0 0.0
    %201 = vmatprep.subr.mxu0 0.0
    %202 = vmatpush1.msra.mxu0 0.0
    %203 = vmatprep.mubr.f32.mxu0 0.0
    %204 = vmatmul.mubr.f32.gmra.mrb[0].mxu0 %v137
    %v205 = vpop.f32.mrb[0].mxu0
    %v206 = vadd.f32 %v133, %v205
    %v207 = vpop.f32.mrb[0].mxu0
    %208 = vdwg.mxu0
    %v209 = vmax.f32 %v206, 0.0
    %v210 = vld [vmem:[%s5] sm:$0xff]
    %v211 = vld [vmem:[%s5 + $0x8] sm:$0xff]
    %v212 = vld [vmem:[%s5 + $0x10] sm:$0xff]
    %v213 = vld [vmem:[%s5 + $0x18] sm:$0xff]
    %v214 = vld [vmem:[%s6] sm:$0x1]
    %v216 = vlaneseq
    %v217 = vshrl.u32 %v216, 7
    %v218 = vsub.s32 0, %v217
    %v219 = vrot.slane %v214, %v218
    %v222 = vsel %vm135, %v209, 0
    %224 = vmatprep.subr.mxu0 0.0
    %225 = vmatpush1.msra.mxu0 %v210
    %226 = vmatprep.subr.mxu0 0.0
    %227 = vmatpush1.msra.mxu0 %v211
    %228 = vmatprep.subr.mxu0 0.0
    %229 = vmatpush1.msra.mxu0 %v212
    %230 = vmatprep.subr.mxu0 0.0
    %231 = vmatpush1.msra.mxu0 %v213
    %232 = vmatprep.subr.mxu0 0.0
    %233 = vmatpush1.msra.mxu0 0.0
    %234 = vmatprep.subr.mxu0 0.0
    %235 = vmatpush1.msra.mxu0 0.0
    %236 = vmatprep.subr.mxu0 0.0
    %237 = vmatpush1.msra.mxu0 0.0
    %238 = vmatprep.subr.mxu0 0.0
    %239 = vmatpush1.msra.mxu0 0.0
    %240 = vmatprep.subr.mxu0 0.0
    %241 = vmatpush1.msra.mxu0 0.0
    %242 = vmatprep.subr.mxu0 0.0
    %243 = vmatpush1.msra.mxu0 0.0
    %244 = vmatprep.subr.mxu0 0.0
    %245 = vmatpush1.msra.mxu0 0.0
    %246 = vmatprep.subr.mxu0 0.0
    %247 = vmatpush1.msra.mxu0 0.0
    %248 = vmatprep.subr.mxu0 0.0
    %249 = vmatpush1.msra.mxu0 0.0
    %250 = vmatprep.subr.mxu0 0.0
    %251 = vmatpush1.msra.mxu0 0.0
    %252 = vmatprep.subr.mxu0 0.0
    %253 = vmatpush1.msra.mxu0 0.0
    %254 = vmatprep.subr.mxu0 0.0
    %255 = vmatpush1.msra.mxu0 0.0
    %256 = vmatprep.subr.mxu0 0.0
    %257 = vmatpush1.msra.mxu0 0.0
    %258 = vmatprep.subr.mxu0 0.0
    %259 = vmatpush1.msra.mxu0 0.0
    %260 = vmatprep.subr.mxu0 0.0
    %261 = vmatpush1.msra.mxu0 0.0
    %262 = vmatprep.subr.mxu0 0.0
    %263 = vmatpush1.msra.mxu0 0.0
    %264 = vmatprep.subr.mxu0 0.0
    %265 = vmatpush1.msra.mxu0 0.0
    %266 = vmatprep.subr.mxu0 0.0
    %267 = vmatpush1.msra.mxu0 0.0
    %268 = vmatprep.subr.mxu0 0.0
    %269 = vmatpush1.msra.mxu0 0.0
    %270 = vmatprep.subr.mxu0 0.0
    %271 = vmatpush1.msra.mxu0 0.0
    %272 = vmatprep.subr.mxu0 0.0
    %273 = vmatpush1.msra.mxu0 0.0
    %274 = vmatprep.subr.mxu0 0.0
    %275 = vmatpush1.msra.mxu0 0.0
    %276 = vmatprep.subr.mxu0 0.0
    %277 = vmatpush1.msra.mxu0 0.0
    %278 = vmatprep.subr.mxu0 0.0
    %279 = vmatpush1.msra.mxu0 0.0
    %280 = vmatprep.subr.mxu0 0.0
    %281 = vmatpush1.msra.mxu0 0.0
    %282 = vmatprep.subr.mxu0 0.0
    %283 = vmatpush1.msra.mxu0 0.0
    %284 = vmatprep.subr.mxu0 0.0
    %285 = vmatpush1.msra.mxu0 0.0
    %286 = vmatprep.subr.mxu0 0.0
    %287 = vmatpush1.msra.mxu0 0.0
    %288 = vmatprep.mubr.f32.mxu0 0.0
    %289 = vmatmul.mubr.f32.gmra.mrb[0].mxu0 %v222
    %v290 = vpop.f32.mrb[0].mxu0
    %v291 = vadd.f32 %v219, %v290
    %v292 = vpop.f32.mrb[0].mxu0
    %293 = vdwg.mxu0
    %vm294 = vcmask 64512
    %295 = vst.msk [vmem:[#allocation5] sm:$0xff] %vm294, %v291
    // Predicated region
    $region34: #{tpu_custom_call.1} parent=1 // pred_check
      _
    $region35: #{tpu_custom_call.1} parent=1 // pred_check_branch
      %297 = sbr.rel (0) target = $region37
    $region36: #{tpu_custom_call.1} parent=1 // pred_region
      %s299 = ssub.s32 128, 128
      %300 = vsyncadd [#allocation4], %s299
      %s302 = sshll.u32 [#allocation5], 4
      %s303 = int_to_ptr.vmem [resolvable:$true] %s302
      %305 = dma.vmem_to_hbm [thread:$0]  %s303, 128, %s7, [#allocation4]
    $region37: #{tpu_custom_call.1} parent=1 // pred_fallthru
      _
    // Predicated region
    $region38: #{tpu_custom_call.1} parent=1 // pred_check
      _
    $region39: #{tpu_custom_call.1} parent=1 // pred_check_branch
      %307 = sbr.rel (0) target = $region41
    $region40: #{tpu_custom_call.1} parent=1 // pred_region
      %308 = dma.done [#allocation4], 128
    $region41: #{tpu_custom_call.1} parent=1 // pred_fallthru
      _
    %309 = vsyncpa [#allocation3], 1
    %310 = vsyncpa [#allocation4], 1

</llo_original>
